<compile_context>
chip_gen: v6e
topology: v6e:2x2x1
jax: 0.10.0
libtpu: 0.0.40
codegen_flags: <defaults>
</compile_context>

<pallas_src>
import jax
import jax.numpy as jnp
from jax.experimental import pallas as pl
from jax.experimental.pallas import tpu as pltpu
from jax.scipy.linalg import block_diag

NEG_SLOPE = 0.01  # nn.LeakyReLU default negative_slope


def _leaky_relu(v):
    # Exact for 0 < slope < 1; mul+max (2 VPU ops) instead of cmp+mul+select.
    return jnp.maximum(v, NEG_SLOPE * v)


def _round_up(x, m):
    return (x + m - 1) // m * m


# ---------------------------------------------------------------------------
# Kernels (batch on the lane axis; activations are (features, tb))
# ---------------------------------------------------------------------------

def _rm_kernel_fused(xin_ref, w1_ref, b1_ref, w2_ref, b2_ref, wc_ref, wt_ref,
                     out_ref):
    """Both branches per layer in one 256-wide MXU matmul (v6e / v7x).

    xin_ref: (2D+4, tb) compute_dtype; rows [0:2D] = [state; state_]^T,
             rows [2D:2D+4] = [action; reward; done; 1]^T.
    """
    xin = xin_ref[...]
    k = w1_ref.shape[1]                      # 2D
    s = xin[:k, :]                           # (2D, tb)
    ard = xin[k:, :]                         # (4, tb)

    h = jnp.dot(w1_ref[...], s, preferred_element_type=jnp.float32)
    h = _leaky_relu(h + b1_ref[...])
    h = jnp.dot(w2_ref[...], h.astype(w2_ref.dtype),
                preferred_element_type=jnp.float32)
    h = _leaky_relu(h + b2_ref[...])

    z = jnp.dot(wc_ref[...], h.astype(wc_ref.dtype),
                preferred_element_type=jnp.float32)              # (1, tb)
    z = z + jnp.dot(wt_ref[...], ard, preferred_element_type=jnp.float32)
    out_ref[...] = jax.nn.sigmoid(z)                             # lane-dense


def _rm_kernel_split(xin_ref, w1_ref, b1_ref, w1n_ref, b1n_ref,
                     w2_ref, b2_ref, w2n_ref, b2n_ref,
                     wcx_ref, wcxn_ref, wt_ref, out_ref):
    """Per-branch 128-wide matmuls (matches v5e's 128x128 MXU)."""
    xin = xin_ref[...]
    d = w1_ref.shape[1]                      # D
    s = xin[:d, :]
    sn = xin[d:2 * d, :]
    ard = xin[2 * d:, :]                     # (4, tb)

    x = _leaky_relu(jnp.dot(w1_ref[...], s,
                            preferred_element_type=jnp.float32) + b1_ref[...])
    x = _leaky_relu(jnp.dot(w2_ref[...], x.astype(w2_ref.dtype),
                            preferred_element_type=jnp.float32) + b2_ref[...])
    xn = _leaky_relu(jnp.dot(w1n_ref[...], sn,
                             preferred_element_type=jnp.float32) + b1n_ref[...])
    xn = _leaky_relu(jnp.dot(w2n_ref[...], xn.astype(w2n_ref.dtype),
                             preferred_element_type=jnp.float32) + b2n_ref[...])

    z = jnp.dot(wcx_ref[...], x.astype(wcx_ref.dtype),
                preferred_element_type=jnp.float32)
    z = z + jnp.dot(wcxn_ref[...], xn.astype(wcxn_ref.dtype),
                    preferred_element_type=jnp.float32)
    z = z + jnp.dot(wt_ref[...], ard, preferred_element_type=jnp.float32)
    out_ref[...] = jax.nn.sigmoid(z)


# ---------------------------------------------------------------------------
# Host-side weight packing (weights in (out, in) orientation for W @ h)
# ---------------------------------------------------------------------------

def _pack_fused(params, cd):
    w1 = block_diag(params["w1"], params["w1n"]).T.astype(cd)            # (2F1, 2D)
    b1 = jnp.concatenate([params["b1"], params["b1n"]], 1).T.astype(jnp.float32)
    w2 = block_diag(params["w2"], params["w2n"]).T.astype(cd)            # (2F2, 2F1)
    b2 = jnp.concatenate([params["b2"], params["b2n"]], 1).T.astype(jnp.float32)
    wc = jnp.concatenate([params["wcx"], params["wcxn"]], 0).T.astype(cd)  # (1, 2F2)
    wt = jnp.concatenate([params["wcard"], params["bc"]], 0).T.astype(cd)  # (1, 4)
    return w1, b1, w2, b2, wc, wt


def _pack_split(params, cd):
    wt = jnp.concatenate([params["wcard"], params["bc"]], 0).T.astype(cd)  # (1, 4)
    return (params["w1"].T.astype(cd), params["b1"].T.astype(jnp.float32),
            params["w1n"].T.astype(cd), params["b1n"].T.astype(jnp.float32),
            params["w2"].T.astype(cd), params["b2"].T.astype(jnp.float32),
            params["w2n"].T.astype(cd), params["b2n"].T.astype(jnp.float32),
            params["wcx"].T.astype(cd),                                   # (1, F2)
            params["wcxn"].T.astype(cd),                                  # (1, F2)
            wt)


def _resident_spec(arr):
    # Constant block index -> fetched once, stays VMEM-resident across the grid.
    return pl.BlockSpec(arr.shape, lambda i: (0, 0))


def _default_fuse_branches():
    # Fusion targets the 256-wide MXUs of v6e/v7x; on v5e (128x128 MXU) the
    # block-diagonal layer-2 would double K work, so keep branches split there.
    try:
        kind = jax.devices()[0].device_kind.lower()
    except Exception:
        return True
    return not ("v5 lite" in kind or "v5e" in kind or "v5lite" in kind)


def _choose_tiles(B, block_b):
    block_b = max(128, _round_up(block_b, 128))
    ntiles = pl.cdiv(B, block_b)
    # Prefer a grid of >= 2 when each tile still gets >= 128 rows: lets the
    # "parallel" batch axis use both v7x TensorCores; negligible elsewhere.
    if ntiles == 1 and B >= 256:
        ntiles = 2
    tb = min(_round_up(pl.cdiv(B, ntiles), 128), 4096)   # VMEM cap (~15 MiB temps)
    ntiles = pl.cdiv(B, tb)
    return tb, tb * ntiles, ntiles


# ---------------------------------------------------------------------------
# Forward wrapper
# ---------------------------------------------------------------------------

def rm_forward(params, state, state_, action, reward, done, *,
               compute_dtype=jnp.bfloat16, fuse_branches=None, block_b=2048):
    if fuse_branches is None:
        fuse_branches = _default_fuse_branches()
    cd = compute_dtype

    B = state.shape[0]
    tb, b_pad, ntiles = _choose_tiles(B, block_b)

    # One fused concat+cast+transpose+pad pass -> (2D+4, b_pad) in compute
    # dtype; feature axis on sublanes, batch on lanes (not lane-padded in HBM).
    parts = [state, state_, action, reward, done, jnp.ones((B, 1), cd)]
    xin = jnp.concatenate([p.astype(cd) for p in parts], axis=1).T
    if b_pad != B:
        xin = jnp.pad(xin, ((0, 0), (0, b_pad - B)))
    nfeat = xin.shape[0]

    xin_spec = pl.BlockSpec((nfeat, tb), lambda i: (0, i))
    out_spec = pl.BlockSpec((1, tb), lambda i: (0, i))           # lane-dense rows
    out_shape = jax.ShapeDtypeStruct((1, b_pad), jnp.float32)
    compiler_params = pltpu.CompilerParams(
        dimension_semantics=("parallel",))                       # megacore on v7x

    if fuse_branches:
        weights = _pack_fused(params, cd)
        kernel = _rm_kernel_fused
    else:
        weights = _pack_split(params, cd)
        kernel = _rm_kernel_split

    out = pl.pallas_call(
        kernel,
        out_shape=out_shape,
        grid=(ntiles,),
        in_specs=[xin_spec] + [_resident_spec(w) for w in weights],
        out_specs=out_spec,
        compiler_params=compiler_params,
    )(xin, *weights)

    return out[0, :B][:, None]                                   # back to (B, 1)


# ---------------------------------------------------------------------------
# Params + pure-JAX reference
# ---------------------------------------------------------------------------

def init_params(key, input_dim, fc1_dims=128, fc2_dims=128):
    """PyTorch-style uniform(-1/sqrt(fan_in), 1/sqrt(fan_in)) init.

    Weights stored as (in_features, out_features) (transposed vs PyTorch)."""
    def linear(key, fan_in, fan_out):
        kw, kb = jax.random.split(key)
        bound = 1.0 / jnp.sqrt(fan_in)
        w = jax.random.uniform(kw, (fan_in, fan_out), jnp.float32, -bound, bound)
        b = jax.random.uniform(kb, (1, fan_out), jnp.float32, -bound, bound)
        return w, b

    k1, k1n, k2, k2n, kc = jax.random.split(key, 5)
    w1, b1 = linear(k1, input_dim, fc1_dims)
    w1n, b1n = linear(k1n, input_dim, fc1_dims)
    w2, b2 = linear(k2, fc1_dims, fc2_dims)
    w2n, b2n = linear(k2n, fc1_dims, fc2_dims)
    wc, bc = linear(kc, 2 * fc2_dims + 3, 1)   # combined: (259, 1)

    return dict(
        w1=w1, b1=b1, w1n=w1n, b1n=b1n,
        w2=w2, b2=b2, w2n=w2n, b2n=b2n,
        wcx=wc[:fc2_dims, :],                  # (128, 1)
        wcxn=wc[fc2_dims:2 * fc2_dims, :],     # (128, 1)
        wcard=wc[2 * fc2_dims:, :],            # (3, 1)
        bc=bc,                                 # (1, 1)
    )


def rm_forward_ref(params, state, state_, action, reward, done):
    """Pure-JAX reference of the PyTorch forward (batched cat dim=1 path)."""
    x = _leaky_relu(state @ params["w1"] + params["b1"])
    x = _leaky_relu(x @ params["w2"] + params["b2"])
    xn = _leaky_relu(state_ @ params["w1n"] + params["b1n"])
    xn = _leaky_relu(xn @ params["w2n"] + params["b2n"])
    combined = jnp.concatenate([x, xn, action, reward, done], axis=1)
    wc = jnp.concatenate([params["wcx"], params["wcxn"], params["wcard"]], axis=0)
    return jax.nn.sigmoid(combined @ wc + params["bc"])


# TODO(synk): the PyTorch try/except torch.cat(dim=0) fallback (unbatched 1-D
# inputs) is not implemented; only the batched dim=1 path is supported.

if __name__ == "__main__":
    B, D, FC1, FC2 = 8, 8, 128, 128

    key = jax.random.PRNGKey(0)
    kp, ks, ksn, ka, kr, kd, kbig = jax.random.split(key, 7)

    params = init_params(kp, D, FC1, FC2)

    state = jax.random.normal(ks, (B, D), jnp.float32)
    state_ = jax.random.normal(ksn, (B, D), jnp.float32)
    action = jax.random.normal(ka, (B, 1), jnp.float32)
    reward = jax.random.normal(kr, (B, 1), jnp.float32)
    done = (jax.random.uniform(kd, (B, 1)) > 0.5).astype(jnp.float32)

    ref = rm_forward_ref(params, state, state_, action, reward, done)

    # Fused-branch kernel (256-wide matmuls; default on v6e/v7x), f32 operands.
    out = jax.block_until_ready(
        rm_forward(params, state, state_, action, reward, done,
                   compute_dtype=jnp.float32, fuse_branches=True))
    assert out.shape == (B, 1)
    assert jnp.allclose(out, ref, atol=1e-4, rtol=1e-4)

    # Split-branch kernel (default on v5e), f32 operands.
    out_split = jax.block_until_ready(
        rm_forward(params, state, state_, action, reward, done,
                   compute_dtype=jnp.float32, fuse_branches=False))
    assert jnp.allclose(out_split, ref, atol=1e-4, rtol=1e-4)

    # Default path: bf16 MXU operands, f32 accumulation + f32 bias/VPU/EUP.
    out_bf16 = jax.block_until_ready(
        rm_forward(params, state, state_, action, reward, done))
    assert jnp.allclose(out_bf16, ref, atol=5e-2, rtol=5e-2)

    # Multi-tile grid + ragged batch (B=300, block_b=128 -> grid of 3, padded).
    B2 = 300
    k1, k2, k3, k4, k5 = jax.random.split(kbig, 5)
    state2 = jax.random.normal(k1, (B2, D), jnp.float32)
    state2_ = jax.random.normal(k2, (B2, D), jnp.float32)
    action2 = jax.random.normal(k3, (B2, 1), jnp.float32)
    reward2 = jax.random.normal(k4, (B2, 1), jnp.float32)
    done2 = (jax.random.uniform(k5, (B2, 1)) > 0.5).astype(jnp.float32)

    ref2 = rm_forward_ref(params, state2, state2_, action2, reward2, done2)
    out2 = jax.block_until_ready(
        rm_forward(params, state2, state2_, action2, reward2, done2,
                   compute_dtype=jnp.float32, fuse_branches=True, block_b=128))
    assert out2.shape == (B2, 1)
    assert jnp.allclose(out2, ref2, atol=1e-4, rtol=1e-4)

    # Default tiling on a medium batch (grid bumped to 2 tiles for megacore).
    out2_dflt = jax.block_until_ready(
        rm_forward(params, state2, state2_, action2, reward2, done2))
    assert jnp.allclose(out2_dflt, ref2, atol=5e-2, rtol=5e-2)

    print("KERNEL_OK")
</pallas_src>

<mosaic_0001>
module attributes {stable_mosaic.version = 11 : i64} {
  func.func @_rm_kernel_fused(%arg0: i32, %arg1: memref<20x128xf32, #tpu.memory_space<vmem>>, %arg2: memref<256x16xf32, #tpu.memory_space<vmem>>, %arg3: memref<256x1xf32, #tpu.memory_space<vmem>>, %arg4: memref<256x256xf32, #tpu.memory_space<vmem>>, %arg5: memref<256x1xf32, #tpu.memory_space<vmem>>, %arg6: memref<1x256xf32, #tpu.memory_space<vmem>>, %arg7: memref<1x4xf32, #tpu.memory_space<vmem>>, %arg8: memref<1x128xf32, #tpu.memory_space<vmem>>) attributes {dimension_semantics = [#tpu.dimension_semantics<parallel>], iteration_bounds = array<i64: 1>, scalar_prefetch = 0 : i64, scratch_operands = 0 : i64, tpu.core_type = #tpu.core_type<tc>, window_params = [{transform_indices = @transform_0, window_bounds = array<i64: 20, 128>}, {pipeline_mode = #tpu.pipeline_mode<synchronous>, transform_indices = @transform_1, window_bounds = array<i64: 256, 16>}, {pipeline_mode = #tpu.pipeline_mode<synchronous>, transform_indices = @transform_2, window_bounds = array<i64: 256, 1>}, {pipeline_mode = #tpu.pipeline_mode<synchronous>, transform_indices = @transform_3, window_bounds = array<i64: 256, 256>}, {pipeline_mode = #tpu.pipeline_mode<synchronous>, transform_indices = @transform_4, window_bounds = array<i64: 256, 1>}, {pipeline_mode = #tpu.pipeline_mode<synchronous>, transform_indices = @transform_5, window_bounds = array<i64: 1, 256>}, {pipeline_mode = #tpu.pipeline_mode<synchronous>, transform_indices = @transform_6, window_bounds = array<i64: 1, 4>}, {transform_indices = @transform_7, window_bounds = array<i64: 1, 128>}]} {
    %c0 = arith.constant 0 : index
    %c0_0 = arith.constant 0 : index
    %0 = vector.load %arg1[%c0, %c0_0] : memref<20x128xf32, #tpu.memory_space<vmem>>, vector<20x128xf32>
    %1 = vector.extract_strided_slice %0 {offsets = [0, 0], sizes = [16, 128], strides = [1, 1]} : vector<20x128xf32> to vector<16x128xf32>
    %2 = vector.extract_strided_slice %0 {offsets = [16, 0], sizes = [4, 128], strides = [1, 1]} : vector<20x128xf32> to vector<4x128xf32>
    %c0_1 = arith.constant 0 : index
    %c0_2 = arith.constant 0 : index
    %3 = vector.load %arg2[%c0_1, %c0_2] : memref<256x16xf32, #tpu.memory_space<vmem>>, vector<256x16xf32>
    %cst = arith.constant dense<0.000000e+00> : vector<256x128xf32>
    %4 = tpu.matmul %3, %1, %cst {dimension_numbers = #tpu.dot_dimension_numbers<[1], [0], [0], [1], [0, 0, 1, 1], [], []>} : vector<256x16xf32>, vector<16x128xf32>, vector<256x128xf32> -> vector<256x128xf32>
    %c0_3 = arith.constant 0 : index
    %c0_4 = arith.constant 0 : index
    %5 = vector.load %arg3[%c0_3, %c0_4] : memref<256x1xf32, #tpu.memory_space<vmem>>, vector<256x1xf32>
    %6 = vector.broadcast %5 : vector<256x1xf32> to vector<256x128xf32>
    %7 = arith.addf %4, %6 : vector<256x128xf32>
    %cst_5 = arith.constant 0.00999999977 : f32
    %8 = vector.broadcast %cst_5 : f32 to vector<256x128xf32>
    %9 = arith.mulf %8, %7 : vector<256x128xf32>
    %10 = arith.maximumf %7, %9 : vector<256x128xf32>
    %c0_6 = arith.constant 0 : index
    %c0_7 = arith.constant 0 : index
    %11 = vector.load %arg4[%c0_6, %c0_7] : memref<256x256xf32, #tpu.memory_space<vmem>>, vector<256x256xf32>
    %cst_8 = arith.constant dense<0.000000e+00> : vector<256x128xf32>
    %12 = tpu.matmul %11, %10, %cst_8 {dimension_numbers = #tpu.dot_dimension_numbers<[1], [0], [0], [1], [0, 0, 1, 1], [], []>} : vector<256x256xf32>, vector<256x128xf32>, vector<256x128xf32> -> vector<256x128xf32>
    %c0_9 = arith.constant 0 : index
    %c0_10 = arith.constant 0 : index
    %13 = vector.load %arg5[%c0_9, %c0_10] : memref<256x1xf32, #tpu.memory_space<vmem>>, vector<256x1xf32>
    %14 = vector.broadcast %13 : vector<256x1xf32> to vector<256x128xf32>
    %15 = arith.addf %12, %14 : vector<256x128xf32>
    %cst_11 = arith.constant 0.00999999977 : f32
    %16 = vector.broadcast %cst_11 : f32 to vector<256x128xf32>
    %17 = arith.mulf %16, %15 : vector<256x128xf32>
    %18 = arith.maximumf %15, %17 : vector<256x128xf32>
    %c0_12 = arith.constant 0 : index
    %c0_13 = arith.constant 0 : index
    %19 = vector.load %arg6[%c0_12, %c0_13] : memref<1x256xf32, #tpu.memory_space<vmem>>, vector<1x256xf32>
    %cst_14 = arith.constant dense<0.000000e+00> : vector<1x128xf32>
    %20 = tpu.matmul %19, %18, %cst_14 {dimension_numbers = #tpu.dot_dimension_numbers<[1], [0], [0], [1], [0, 0, 1, 1], [], []>} : vector<1x256xf32>, vector<256x128xf32>, vector<1x128xf32> -> vector<1x128xf32>
    %c0_15 = arith.constant 0 : index
    %c0_16 = arith.constant 0 : index
    %21 = vector.load %arg7[%c0_15, %c0_16] : memref<1x4xf32, #tpu.memory_space<vmem>>, vector<1x4xf32>
    %cst_17 = arith.constant dense<0.000000e+00> : vector<1x128xf32>
    %22 = tpu.matmul %21, %2, %cst_17 {dimension_numbers = #tpu.dot_dimension_numbers<[1], [0], [0], [1], [0, 0, 1, 1], [], []>} : vector<1x4xf32>, vector<4x128xf32>, vector<1x128xf32> -> vector<1x128xf32>
    %23 = arith.addf %20, %22 : vector<1x128xf32>
    %24 = arith.negf %23 : vector<1x128xf32>
    %25 = math.exp %24 : vector<1x128xf32>
    %cst_18 = arith.constant 1.000000e+00 : f32
    %26 = vector.broadcast %cst_18 : f32 to vector<1x128xf32>
    %27 = arith.addf %26, %25 : vector<1x128xf32>
    %28 = arith.divf %26, %27 : vector<1x128xf32>
    %c0_19 = arith.constant 0 : index
    %c0_20 = arith.constant 0 : index
    %29 = vector.load %arg8[%c0_19, %c0_20] : memref<1x128xf32, #tpu.memory_space<vmem>>, vector<1x128xf32>
    tpu.vector_store %arg8[%c0_19, %c0_20], %28 {strides = array<i32>} : memref<1x128xf32, #tpu.memory_space<vmem>>, vector<1x128xf32>,
    return
  }
  func.func @transform_0(%arg0: i32) -> (i32, i32) {
    %c0_i32 = arith.constant 0 : i32
    %c0_i32_0 = arith.constant 0 : i32
    return %c0_i32, %arg0 : i32, i32
  }
  func.func @transform_1(%arg0: i32) -> (i32, i32) {
    %c0_i32 = arith.constant 0 : i32
    %c0_i32_0 = arith.constant 0 : i32
    %c0_i32_1 = arith.constant 0 : i32
    return %c0_i32, %c0_i32_0 : i32, i32
  }
  func.func @transform_2(%arg0: i32) -> (i32, i32) {
    %c0_i32 = arith.constant 0 : i32
    %c0_i32_0 = arith.constant 0 : i32
    %c0_i32_1 = arith.constant 0 : i32
    return %c0_i32, %c0_i32_0 : i32, i32
  }
  func.func @transform_3(%arg0: i32) -> (i32, i32) {
    %c0_i32 = arith.constant 0 : i32
    %c0_i32_0 = arith.constant 0 : i32
    %c0_i32_1 = arith.constant 0 : i32
    return %c0_i32, %c0_i32_0 : i32, i32
  }
  func.func @transform_4(%arg0: i32) -> (i32, i32) {
    %c0_i32 = arith.constant 0 : i32
    %c0_i32_0 = arith.constant 0 : i32
    %c0_i32_1 = arith.constant 0 : i32
    return %c0_i32, %c0_i32_0 : i32, i32
  }
  func.func @transform_5(%arg0: i32) -> (i32, i32) {
    %c0_i32 = arith.constant 0 : i32
    %c0_i32_0 = arith.constant 0 : i32
    %c0_i32_1 = arith.constant 0 : i32
    return %c0_i32, %c0_i32_0 : i32, i32
  }
  func.func @transform_6(%arg0: i32) -> (i32, i32) {
    %c0_i32 = arith.constant 0 : i32
    %c0_i32_0 = arith.constant 0 : i32
    %c0_i32_1 = arith.constant 0 : i32
    return %c0_i32, %c0_i32_0 : i32, i32
  }
  func.func @transform_7(%arg0: i32) -> (i32, i32) {
    %c0_i32 = arith.constant 0 : i32
    %c0_i32_0 = arith.constant 0 : i32
    return %c0_i32, %arg0 : i32, i32
  }
}

</mosaic_0001>

<llo_original>
// kernel: tpu_custom_call.1
$region0: #{tpu_custom_call.1}
  #allocation0 [shape = 'u32[]', space=smem, size = 0x4, offset = 0x4, fixed_abs, tag = 'smem constant byte address 0x4 - core index']
  #allocation1 [shape = 'u32[144,128]{1,0:T(1,128)}', space=vmem, size = 0x12000, scoped, tag = 'internal scratch']
  %s0 = inlined_call_operand.vmem [shape: f32[20,128], index: 0, kind: input, shape index: {}]
  %s1 = inlined_call_operand.vmem [shape: f32[256,16], index: 1, kind: input, shape index: {}]
  %s2 = inlined_call_operand.vmem [shape: f32[256,1], index: 2, kind: input, shape index: {}]
  %s3 = inlined_call_operand.vmem [shape: f32[256,256], index: 3, kind: input, shape index: {}]
  %s4 = inlined_call_operand.vmem [shape: f32[256,1], index: 4, kind: input, shape index: {}]
  %s5 = inlined_call_operand.vmem [shape: f32[1,256], index: 5, kind: input, shape index: {}]
  %s6 = inlined_call_operand.vmem [shape: f32[1,4], index: 6, kind: input, shape index: {}]
  %s7 = inlined_call_operand.hbm [shape: f32[1,128], index: 7, kind: output, shape index: {}]
  %s8 = sld [smem:[#allocation0]]
  $region38: #{tpu_custom_call.1} parent=0
    _
  %s10 = ssub.s32 1, %s8
  %s11 = scalar_select 0, %s10, %s8
  $region1: #{tpu_custom_call.1} parent=0
    #allocation2 [shape = 'u8[512]{0}', space=vmem, size = 0x400, scoped, tag = 'output window, operand 0, single buffered']
    #allocation3 [shape = 's32[1]{0}', space=sflag, size = 0x4, scoped, tag = 'scoped memory for tpu_custom_call.1']
    %12 = vsyncpa [#allocation3], 0
    // Predicated region
    $region2: #{tpu_custom_call.1} parent=1 // pred_check
      _
    $region3: #{tpu_custom_call.1} parent=1 // pred_check_branch
      %14 = sbr.rel (0) target = $region5
    $region4: #{tpu_custom_call.1} parent=1 // pred_region
      _
    $region5: #{tpu_custom_call.1} parent=1 // pred_fallthru
      _
    // Predicated region
    $region6: #{tpu_custom_call.1} parent=1 // pred_check
      _
    $region7: #{tpu_custom_call.1} parent=1 // pred_check_branch
      %16 = sbr.rel (0) target = $region9
    $region8: #{tpu_custom_call.1} parent=1 // pred_region
      _
    $region9: #{tpu_custom_call.1} parent=1 // pred_fallthru
      _
    // Predicated region
    $region10: #{tpu_custom_call.1} parent=1 // pred_check
      _
    $region11: #{tpu_custom_call.1} parent=1 // pred_check_branch
      %18 = sbr.rel (0) target = $region13
    $region12: #{tpu_custom_call.1} parent=1 // pred_region
      _
    $region13: #{tpu_custom_call.1} parent=1 // pred_fallthru
      _
    // Predicated region
    $region14: #{tpu_custom_call.1} parent=1 // pred_check
      _
    $region15: #{tpu_custom_call.1} parent=1 // pred_check_branch
      %20 = sbr.rel (0) target = $region17
    $region16: #{tpu_custom_call.1} parent=1 // pred_region
      _
    $region17: #{tpu_custom_call.1} parent=1 // pred_fallthru
      _
    // Predicated region
    $region18: #{tpu_custom_call.1} parent=1 // pred_check
      _
    $region19: #{tpu_custom_call.1} parent=1 // pred_check_branch
      %22 = sbr.rel (0) target = $region21
    $region20: #{tpu_custom_call.1} parent=1 // pred_region
      _
    $region21: #{tpu_custom_call.1} parent=1 // pred_fallthru
      _
    // Predicated region
    $region22: #{tpu_custom_call.1} parent=1 // pred_check
      _
    $region23: #{tpu_custom_call.1} parent=1 // pred_check_branch
      %24 = sbr.rel (0) target = $region25
    $region24: #{tpu_custom_call.1} parent=1 // pred_region
      _
    $region25: #{tpu_custom_call.1} parent=1 // pred_fallthru
      _
    // Predicated region
    $region26: #{tpu_custom_call.1} parent=1 // pred_check
      _
    $region27: #{tpu_custom_call.1} parent=1 // pred_check_branch
      %26 = sbr.rel (0) target = $region29
    $region28: #{tpu_custom_call.1} parent=1 // pred_region
      _
    $region29: #{tpu_custom_call.1} parent=1 // pred_fallthru
      _
    %v27 = vld [vmem:[%s0] sm:$0xff]
    %v28 = vld [vmem:[%s0 + $0x8] sm:$0xff]
    %v29 = vld [vmem:[%s0 + $0x10] sm:$0xf]
    %v30 = vld [vmem:[%s1] sm:$0xff]
    %v31 = vld [vmem:[%s1 + $0x8] sm:$0xff]
    %v32 = vld [vmem:[%s1 + $0x10] sm:$0xff]
    %v33 = vld [vmem:[%s1 + $0x18] sm:$0xff]
    %v34 = vld [vmem:[%s1 + $0x20] sm:$0xff]
    %v35 = vld [vmem:[%s1 + $0x28] sm:$0xff]
    %v36 = vld [vmem:[%s1 + $0x30] sm:$0xff]
    %v37 = vld [vmem:[%s1 + $0x38] sm:$0xff]
    %v38 = vld [vmem:[%s1 + $0x40] sm:$0xff]
    %v39 = vld [vmem:[%s1 + $0x48] sm:$0xff]
    %v40 = vld [vmem:[%s1 + $0x50] sm:$0xff]
    %v41 = vld [vmem:[%s1 + $0x58] sm:$0xff]
    %v42 = vld [vmem:[%s1 + $0x60] sm:$0xff]
    %v43 = vld [vmem:[%s1 + $0x68] sm:$0xff]
    %v44 = vld [vmem:[%s1 + $0x70] sm:$0xff]
    %v45 = vld [vmem:[%s1 + $0x78] sm:$0xff]
    %v46 = vld [vmem:[%s1 + $0x80] sm:$0xff]
    %v47 = vld [vmem:[%s1 + $0x88] sm:$0xff]
    %v48 = vld [vmem:[%s1 + $0x90] sm:$0xff]
    %v49 = vld [vmem:[%s1 + $0x98] sm:$0xff]
    %v50 = vld [vmem:[%s1 + $0xa0] sm:$0xff]
    %v51 = vld [vmem:[%s1 + $0xa8] sm:$0xff]
    %v52 = vld [vmem:[%s1 + $0xb0] sm:$0xff]
    %v53 = vld [vmem:[%s1 + $0xb8] sm:$0xff]
    %v54 = vld [vmem:[%s1 + $0xc0] sm:$0xff]
    %v55 = vld [vmem:[%s1 + $0xc8] sm:$0xff]
    %v56 = vld [vmem:[%s1 + $0xd0] sm:$0xff]
    %v57 = vld [vmem:[%s1 + $0xd8] sm:$0xff]
    %v58 = vld [vmem:[%s1 + $0xe0] sm:$0xff]
    %v59 = vld [vmem:[%s1 + $0xe8] sm:$0xff]
    %v60 = vld [vmem:[%s1 + $0xf0] sm:$0xff]
    %v61 = vld [vmem:[%s1 + $0xf8] sm:$0xff]
    %v62 = vld [vmem:[%s2] sm:$0xff]
    %v63 = vld [vmem:[%s2 + $0x8] sm:$0xff]
    %v64 = vld [vmem:[%s2 + $0x10] sm:$0xff]
    %v65 = vld [vmem:[%s2 + $0x18] sm:$0xff]
    %v66 = vld [vmem:[%s2 + $0x20] sm:$0xff]
    %v67 = vld [vmem:[%s2 + $0x28] sm:$0xff]
    %v68 = vld [vmem:[%s2 + $0x30] sm:$0xff]
    %v69 = vld [vmem:[%s2 + $0x38] sm:$0xff]
    %v70 = vld [vmem:[%s2 + $0x40] sm:$0xff]
    %v71 = vld [vmem:[%s2 + $0x48] sm:$0xff]
    %v72 = vld [vmem:[%s2 + $0x50] sm:$0xff]
    %v73 = vld [vmem:[%s2 + $0x58] sm:$0xff]
    %v74 = vld [vmem:[%s2 + $0x60] sm:$0xff]
    %v75 = vld [vmem:[%s2 + $0x68] sm:$0xff]
    %v76 = vld [vmem:[%s2 + $0x70] sm:$0xff]
    %v77 = vld [vmem:[%s2 + $0x78] sm:$0xff]
    %v78 = vld [vmem:[%s2 + $0x80] sm:$0xff]
    %v79 = vld [vmem:[%s2 + $0x88] sm:$0xff]
    %v80 = vld [vmem:[%s2 + $0x90] sm:$0xff]
    %v81 = vld [vmem:[%s2 + $0x98] sm:$0xff]
    %v82 = vld [vmem:[%s2 + $0xa0] sm:$0xff]
    %v83 = vld [vmem:[%s2 + $0xa8] sm:$0xff]
    %v84 = vld [vmem:[%s2 + $0xb0] sm:$0xff]
    %v85 = vld [vmem:[%s2 + $0xb8] sm:$0xff]
    %v86 = vld [vmem:[%s2 + $0xc0] sm:$0xff]
    %v87 = vld [vmem:[%s2 + $0xc8] sm:$0xff]
    %v88 = vld [vmem:[%s2 + $0xd0] sm:$0xff]
    %v89 = vld [vmem:[%s2 + $0xd8] sm:$0xff]
    %v90 = vld [vmem:[%s2 + $0xe0] sm:$0xff]
    %v91 = vld [vmem:[%s2 + $0xe8] sm:$0xff]
    %v92 = vld [vmem:[%s2 + $0xf0] sm:$0xff]
    %v93 = vld [vmem:[%s2 + $0xf8] sm:$0xff]
    %95 = vset.pattern.permute.xlu0 0
    %96 = vperm.xlu0 %95, %v62
    %v97 = vpop.permute.xlu0 %96
    %100 = vset.pattern.permute.xlu0 0
    %101 = vperm.xlu0 %100, %v63
    %v102 = vpop.permute.xlu0 %101
    %105 = vset.pattern.permute.xlu0 0
    %106 = vperm.xlu0 %105, %v64
    %v107 = vpop.permute.xlu0 %106
    %110 = vset.pattern.permute.xlu0 0
    %111 = vperm.xlu0 %110, %v65
    %v112 = vpop.permute.xlu0 %111
    %115 = vset.pattern.permute.xlu0 0
    %116 = vperm.xlu0 %115, %v66
    %v117 = vpop.permute.xlu0 %116
    %120 = vset.pattern.permute.xlu0 0
    %121 = vperm.xlu0 %120, %v67
    %v122 = vpop.permute.xlu0 %121
    %125 = vset.pattern.permute.xlu0 0
    %126 = vperm.xlu0 %125, %v68
    %v127 = vpop.permute.xlu0 %126
    %130 = vset.pattern.permute.xlu0 0
    %131 = vperm.xlu0 %130, %v69
    %v132 = vpop.permute.xlu0 %131
    %135 = vset.pattern.permute.xlu0 0
    %136 = vperm.xlu0 %135, %v70
    %v137 = vpop.permute.xlu0 %136
    %140 = vset.pattern.permute.xlu0 0
    %141 = vperm.xlu0 %140, %v71
    %v142 = vpop.permute.xlu0 %141
    %145 = vset.pattern.permute.xlu0 0
    %146 = vperm.xlu0 %145, %v72
    %v147 = vpop.permute.xlu0 %146
    %150 = vset.pattern.permute.xlu0 0
    %151 = vperm.xlu0 %150, %v73
    %v152 = vpop.permute.xlu0 %151
    %155 = vset.pattern.permute.xlu0 0
    %156 = vperm.xlu0 %155, %v74
    %v157 = vpop.permute.xlu0 %156
    %160 = vset.pattern.permute.xlu0 0
    %161 = vperm.xlu0 %160, %v75
    %v162 = vpop.permute.xlu0 %161
    %165 = vset.pattern.permute.xlu0 0
    %166 = vperm.xlu0 %165, %v76
    %v167 = vpop.permute.xlu0 %166
    %170 = vset.pattern.permute.xlu0 0
    %171 = vperm.xlu0 %170, %v77
    %v172 = vpop.permute.xlu0 %171
    %175 = vset.pattern.permute.xlu0 0
    %176 = vperm.xlu0 %175, %v78
    %v177 = vpop.permute.xlu0 %176
    %180 = vset.pattern.permute.xlu0 0
    %181 = vperm.xlu0 %180, %v79
    %v182 = vpop.permute.xlu0 %181
    %185 = vset.pattern.permute.xlu0 0
    %186 = vperm.xlu0 %185, %v80
    %v187 = vpop.permute.xlu0 %186
    %190 = vset.pattern.permute.xlu0 0
    %191 = vperm.xlu0 %190, %v81
    %v192 = vpop.permute.xlu0 %191
    %195 = vset.pattern.permute.xlu0 0
    %196 = vperm.xlu0 %195, %v82
    %v197 = vpop.permute.xlu0 %196
    %200 = vset.pattern.permute.xlu0 0
    %201 = vperm.xlu0 %200, %v83
    %v202 = vpop.permute.xlu0 %201
    %205 = vset.pattern.permute.xlu0 0
    %206 = vperm.xlu0 %205, %v84
    %v207 = vpop.permute.xlu0 %206
    %210 = vset.pattern.permute.xlu0 0
    %211 = vperm.xlu0 %210, %v85
    %v212 = vpop.permute.xlu0 %211
    %215 = vset.pattern.permute.xlu0 0
    %216 = vperm.xlu0 %215, %v86
    %v217 = vpop.permute.xlu0 %216
    %220 = vset.pattern.permute.xlu0 0
    %221 = vperm.xlu0 %220, %v87
    %v222 = vpop.permute.xlu0 %221
    %225 = vset.pattern.permute.xlu0 0
    %226 = vperm.xlu0 %225, %v88
    %v227 = vpop.permute.xlu0 %226
    %230 = vset.pattern.permute.xlu0 0
    %231 = vperm.xlu0 %230, %v89
    %v232 = vpop.permute.xlu0 %231
    %235 = vset.pattern.permute.xlu0 0
    %236 = vperm.xlu0 %235, %v90
    %v237 = vpop.permute.xlu0 %236
    %240 = vset.pattern.permute.xlu0 0
    %241 = vperm.xlu0 %240, %v91
    %v242 = vpop.permute.xlu0 %241
    %245 = vset.pattern.permute.xlu0 0
    %246 = vperm.xlu0 %245, %v92
    %v247 = vpop.permute.xlu0 %246
    %250 = vset.pattern.permute.xlu0 0
    %251 = vperm.xlu0 %250, %v93
    %v252 = vpop.permute.xlu0 %251
    %vm254 = vcmask 130048
    %v256 = vsel %vm254, %v30, 0
    %v259 = vsel %vm254, %v31, 0
    %v262 = vsel %vm254, %v32, 0
    %v265 = vsel %vm254, %v33, 0
    %v268 = vsel %vm254, %v34, 0
    %v271 = vsel %vm254, %v35, 0
    %v274 = vsel %vm254, %v36, 0
    %v277 = vsel %vm254, %v37, 0
    %v280 = vsel %vm254, %v38, 0
    %v283 = vsel %vm254, %v39, 0
    %v286 = vsel %vm254, %v40, 0
    %v289 = vsel %vm254, %v41, 0
    %v292 = vsel %vm254, %v42, 0
    %v295 = vsel %vm254, %v43, 0
    %v298 = vsel %vm254, %v44, 0
    %v301 = vsel %vm254, %v45, 0
    %v304 = vsel %vm254, %v46, 0
    %v307 = vsel %vm254, %v47, 0
    %v310 = vsel %vm254, %v48, 0
    %v313 = vsel %vm254, %v49, 0
    %v316 = vsel %vm254, %v50, 0
    %v319 = vsel %vm254, %v51, 0
    %v322 = vsel %vm254, %v52, 0
    %v325 = vsel %vm254, %v53, 0
    %v328 = vsel %vm254, %v54, 0
    %v331 = vsel %vm254, %v55, 0
    %v334 = vsel %vm254, %v56, 0
    %v337 = vsel %vm254, %v57, 0
    %v340 = vsel %vm254, %v58, 0
    %v343 = vsel %vm254, %v59, 0
    %v346 = vsel %vm254, %v60, 0
    %v349 = vsel %vm254, %v61, 0
    %351 = vmatprep.subr.mxu0 0.0
    %352 = vmatpush1.msra.mxu0 0.0
    %353 = vmatprep.subr.mxu0 0.0
    %354 = vmatpush1.msra.mxu0 0.0
    %355 = vmatprep.subr.mxu0 0.0
    %356 = vmatpush1.msra.mxu0 0.0
    %357 = vmatprep.subr.mxu0 0.0
    %358 = vmatpush1.msra.mxu0 0.0
    %359 = vmatprep.subr.mxu0 0.0
    %360 = vmatpush1.msra.mxu0 0.0
    %361 = vmatprep.subr.mxu0 0.0
    %362 = vmatpush1.msra.mxu0 0.0
    %363 = vmatprep.subr.mxu0 0.0
    %364 = vmatpush1.msra.mxu0 0.0
    %365 = vmatprep.subr.mxu0 0.0
    %366 = vmatpush1.msra.mxu0 0.0
    %367 = vmatprep.subr.mxu0 0.0
    %368 = vmatpush1.msra.mxu0 0.0
    %369 = vmatprep.subr.mxu0 0.0
    %370 = vmatpush1.msra.mxu0 0.0
    %371 = vmatprep.subr.mxu0 0.0
    %372 = vmatpush1.msra.mxu0 0.0
    %373 = vmatprep.subr.mxu0 0.0
    %374 = vmatpush1.msra.mxu0 0.0
    %375 = vmatprep.subr.mxu0 0.0
    %376 = vmatpush1.msra.mxu0 0.0
    %377 = vmatprep.subr.mxu0 0.0
    %378 = vmatpush1.msra.mxu0 0.0
    %379 = vmatprep.subr.mxu0 0.0
    %380 = vmatpush1.msra.mxu0 %v28
    %381 = vmatprep.subr.mxu0 0.0
    %382 = vmatpush1.msra.mxu0 %v27
    %383 = vmatprep.subr.mxu0 0.0
    %384 = vmatpush2.msra.mxu0 0.0
    %385 = vmatprep.subr.mxu0 0.0
    %386 = vmatpush2.msra.mxu0 0.0
    %387 = vmatprep.subr.mxu0 0.0
    %388 = vmatpush2.msra.mxu0 0.0
    %389 = vmatprep.subr.mxu0 0.0
    %390 = vmatpush2.msra.mxu0 0.0
    %391 = vmatprep.subr.mxu0 0.0
    %392 = vmatpush2.msra.mxu0 0.0
    %393 = vmatprep.subr.mxu0 0.0
    %394 = vmatpush2.msra.mxu0 0.0
    %395 = vmatprep.subr.mxu0 0.0
    %396 = vmatpush2.msra.mxu0 0.0
    %397 = vmatprep.subr.mxu0 0.0
    %398 = vmatpush2.msra.mxu0 0.0
    %399 = vmatprep.subr.mxu0 0.0
    %400 = vmatpush2.msra.mxu0 0.0
    %401 = vmatprep.subr.mxu0 0.0
    %402 = vmatpush2.msra.mxu0 0.0
    %403 = vmatprep.subr.mxu0 0.0
    %404 = vmatpush2.msra.mxu0 0.0
    %405 = vmatprep.subr.mxu0 0.0
    %406 = vmatpush2.msra.mxu0 0.0
    %407 = vmatprep.subr.mxu0 0.0
    %408 = vmatpush2.msra.mxu0 0.0
    %409 = vmatprep.subr.mxu0 0.0
    %410 = vmatpush2.msra.mxu0 0.0
    %411 = vmatprep.subr.mxu0 0.0
    %412 = vmatpush2.msra.mxu0 0.0
    %413 = vmatprep.subr.mxu0 0.0
    %414 = vmatpush2.msra.mxu0 0.0
    %415 = vmatprep.mubr.f32.mxu0 0.0
    %416 = vmatmul.mubr.f32.gmra.mxu0 %v256
    %v417 = vpop.f32.mrf.mxu0
    %v418 = vadd.f32 %v97, %v417
    %v419 = vpop.f32.mrf.mxu0
    %420 = vmatprep.mubr.f32.mxu0 0.0
    %421 = vmatmul.mubr.f32.gmra.mxu0 %v259
    %v422 = vpop.f32.mrf.mxu0
    %v423 = vadd.f32 %v102, %v422
    %v424 = vpop.f32.mrf.mxu0
    %425 = vmatprep.mubr.f32.mxu0 0.0
    %426 = vmatmul.mubr.f32.gmra.mxu0 %v262
    %v427 = vpop.f32.mrf.mxu0
    %v428 = vadd.f32 %v107, %v427
    %v429 = vpop.f32.mrf.mxu0
    %430 = vmatprep.mubr.f32.mxu0 0.0
    %431 = vmatmul.mubr.f32.gmra.mxu0 %v265
    %v432 = vpop.f32.mrf.mxu0
    %v433 = vadd.f32 %v112, %v432
    %v434 = vpop.f32.mrf.mxu0
    %435 = vmatprep.mubr.f32.mxu0 0.0
    %436 = vmatmul.mubr.f32.gmra.mxu0 %v268
    %v437 = vpop.f32.mrf.mxu0
    %v438 = vadd.f32 %v117, %v437
    %v439 = vpop.f32.mrf.mxu0
    %440 = vmatprep.mubr.f32.mxu0 0.0
    %441 = vmatmul.mubr.f32.gmra.mxu0 %v271
    %v442 = vpop.f32.mrf.mxu0
    %v443 = vadd.f32 %v122, %v442
    %v444 = vpop.f32.mrf.mxu0
    %445 = vmatprep.mubr.f32.mxu0 0.0
    %446 = vmatmul.mubr.f32.gmra.mxu0 %v274
    %v447 = vpop.f32.mrf.mxu0
    %v448 = vadd.f32 %v127, %v447
    %v449 = vpop.f32.mrf.mxu0
    %450 = vmatprep.mubr.f32.mxu0 0.0
    %451 = vmatmul.mubr.f32.gmra.mxu0 %v277
    %v452 = vpop.f32.mrf.mxu0
    %v453 = vadd.f32 %v132, %v452
    %v454 = vpop.f32.mrf.mxu0
    %455 = vmatprep.mubr.f32.mxu0 0.0
    %456 = vmatmul.mubr.f32.gmra.mxu0 %v280
    %v457 = vpop.f32.mrf.mxu0
    %v458 = vadd.f32 %v137, %v457
    %v459 = vpop.f32.mrf.mxu0
    %460 = vmatprep.mubr.f32.mxu0 0.0
    %461 = vmatmul.mubr.f32.gmra.mxu0 %v283
    %v462 = vpop.f32.mrf.mxu0
    %v463 = vadd.f32 %v142, %v462
    %v464 = vpop.f32.mrf.mxu0
    %465 = vmatprep.mubr.f32.mxu0 0.0
    %466 = vmatmul.mubr.f32.gmra.mxu0 %v286
    %v467 = vpop.f32.mrf.mxu0
    %v468 = vadd.f32 %v147, %v467
    %v469 = vpop.f32.mrf.mxu0
    %470 = vmatprep.mubr.f32.mxu0 0.0
    %471 = vmatmul.mubr.f32.gmra.mxu0 %v289
    %v472 = vpop.f32.mrf.mxu0
    %v473 = vadd.f32 %v152, %v472
    %v474 = vpop.f32.mrf.mxu0
    %475 = vmatprep.mubr.f32.mxu0 0.0
    %476 = vmatmul.mubr.f32.gmra.mxu0 %v292
    %v477 = vpop.f32.mrf.mxu0
    %v478 = vadd.f32 %v157, %v477
    %v479 = vpop.f32.mrf.mxu0
    %480 = vmatprep.mubr.f32.mxu0 0.0
    %481 = vmatmul.mubr.f32.gmra.mxu0 %v295
    %v482 = vpop.f32.mrf.mxu0
    %v483 = vadd.f32 %v162, %v482
    %v484 = vpop.f32.mrf.mxu0
    %485 = vmatprep.mubr.f32.mxu0 0.0
    %486 = vmatmul.mubr.f32.gmra.mxu0 %v298
    %v487 = vpop.f32.mrf.mxu0
    %v488 = vadd.f32 %v167, %v487
    %v489 = vpop.f32.mrf.mxu0
    %490 = vmatprep.mubr.f32.mxu0 0.0
    %491 = vmatmul.mubr.f32.gmra.mxu0 %v301
    %v492 = vpop.f32.mrf.mxu0
    %v493 = vadd.f32 %v172, %v492
    %v494 = vpop.f32.mrf.mxu0
    %495 = vmatprep.mubr.f32.mxu0 0.0
    %496 = vmatmul.mubr.f32.gmra.mxu0 %v304
    %v497 = vpop.f32.mrf.mxu0
    %v498 = vadd.f32 %v177, %v497
    %v499 = vpop.f32.mrf.mxu0
    %500 = vmatprep.mubr.f32.mxu0 0.0
    %501 = vmatmul.mubr.f32.gmra.mxu0 %v307
    %v502 = vpop.f32.mrf.mxu0
    %v503 = vadd.f32 %v182, %v502
    %v504 = vpop.f32.mrf.mxu0
    %505 = vmatprep.mubr.f32.mxu0 0.0
    %506 = vmatmul.mubr.f32.gmra.mxu0 %v310
    %v507 = vpop.f32.mrf.mxu0
    %v508 = vadd.f32 %v187, %v507
    %v509 = vpop.f32.mrf.mxu0
    %510 = vmatprep.mubr.f32.mxu0 0.0
    %511 = vmatmul.mubr.f32.gmra.mxu0 %v313
    %v512 = vpop.f32.mrf.mxu0
    %v513 = vadd.f32 %v192, %v512
    %v514 = vpop.f32.mrf.mxu0
    %515 = vmatprep.mubr.f32.mxu0 0.0
    %516 = vmatmul.mubr.f32.gmra.mxu0 %v316
    %v517 = vpop.f32.mrf.mxu0
    %v518 = vadd.f32 %v197, %v517
    %v519 = vpop.f32.mrf.mxu0
    %520 = vmatprep.mubr.f32.mxu0 0.0
    %521 = vmatmul.mubr.f32.gmra.mxu0 %v319
    %v522 = vpop.f32.mrf.mxu0
    %v523 = vadd.f32 %v202, %v522
    %v524 = vpop.f32.mrf.mxu0
    %525 = vmatprep.mubr.f32.mxu0 0.0
    %526 = vmatmul.mubr.f32.gmra.mxu0 %v322
    %v527 = vpop.f32.mrf.mxu0
    %v528 = vadd.f32 %v207, %v527
    %v529 = vpop.f32.mrf.mxu0
    %530 = vmatprep.mubr.f32.mxu0 0.0
    %531 = vmatmul.mubr.f32.gmra.mxu0 %v325
    %v532 = vpop.f32.mrf.mxu0
    %v533 = vadd.f32 %v212, %v532
    %v534 = vpop.f32.mrf.mxu0
    %535 = vmatprep.mubr.f32.mxu0 0.0
    %536 = vmatmul.mubr.f32.gmra.mxu0 %v328
    %v537 = vpop.f32.mrf.mxu0
    %v538 = vadd.f32 %v217, %v537
    %v539 = vpop.f32.mrf.mxu0
    %540 = vmatprep.mubr.f32.mxu0 0.0
    %541 = vmatmul.mubr.f32.gmra.mxu0 %v331
    %v542 = vpop.f32.mrf.mxu0
    %v543 = vadd.f32 %v222, %v542
    %v544 = vpop.f32.mrf.mxu0
    %545 = vmatprep.mubr.f32.mxu0 0.0
    %546 = vmatmul.mubr.f32.gmra.mxu0 %v334
    %v547 = vpop.f32.mrf.mxu0
    %v548 = vadd.f32 %v227, %v547
    %v549 = vpop.f32.mrf.mxu0
    %550 = vmatprep.mubr.f32.mxu0 0.0
    %551 = vmatmul.mubr.f32.gmra.mxu0 %v337
    %v552 = vpop.f32.mrf.mxu0
    %v553 = vadd.f32 %v232, %v552
    %v554 = vpop.f32.mrf.mxu0
    %555 = vmatprep.mubr.f32.mxu0 0.0
    %556 = vmatmul.mubr.f32.gmra.mxu0 %v340
    %v557 = vpop.f32.mrf.mxu0
    %v558 = vadd.f32 %v237, %v557
    %v559 = vpop.f32.mrf.mxu0
    %560 = vmatprep.mubr.f32.mxu0 0.0
    %561 = vmatmul.mubr.f32.gmra.mxu0 %v343
    %v562 = vpop.f32.mrf.mxu0
    %v563 = vadd.f32 %v242, %v562
    %v564 = vpop.f32.mrf.mxu0
    %565 = vmatprep.mubr.f32.mxu0 0.0
    %566 = vmatmul.mubr.f32.gmra.mxu0 %v346
    %v567 = vpop.f32.mrf.mxu0
    %v568 = vadd.f32 %v247, %v567
    %v569 = vpop.f32.mrf.mxu0
    %570 = vmatprep.mubr.f32.mxu0 0.0
    %571 = vmatmul.mubr.f32.gmra.mxu0 %v349
    %v572 = vpop.f32.mrf.mxu0
    %v573 = vadd.f32 %v252, %v572
    %v574 = vpop.f32.mrf.mxu0
    %575 = vdwg.mxu0
    %v576 = vmul.f32 %v418, 0.01
    %v577 = vmul.f32 %v423, 0.01
    %v578 = vmul.f32 %v428, 0.01
    %v579 = vmul.f32 %v433, 0.01
    %v580 = vmul.f32 %v438, 0.01
    %v581 = vmul.f32 %v443, 0.01
    %v582 = vmul.f32 %v448, 0.01
    %v583 = vmul.f32 %v453, 0.01
    %v584 = vmul.f32 %v458, 0.01
    %v585 = vmul.f32 %v463, 0.01
    %v586 = vmul.f32 %v468, 0.01
    %v587 = vmul.f32 %v473, 0.01
    %v588 = vmul.f32 %v478, 0.01
    %v589 = vmul.f32 %v483, 0.01
    %v590 = vmul.f32 %v488, 0.01
    %v591 = vmul.f32 %v493, 0.01
    %v592 = vmul.f32 %v498, 0.01
    %v593 = vmul.f32 %v503, 0.01
    %v594 = vmul.f32 %v508, 0.01
    %v595 = vmul.f32 %v513, 0.01
    %v596 = vmul.f32 %v518, 0.01
    %v597 = vmul.f32 %v523, 0.01
    %v598 = vmul.f32 %v528, 0.01
    %v599 = vmul.f32 %v533, 0.01
    %v600 = vmul.f32 %v538, 0.01
    %v601 = vmul.f32 %v543, 0.01
    %v602 = vmul.f32 %v548, 0.01
    %v603 = vmul.f32 %v553, 0.01
    %v604 = vmul.f32 %v558, 0.01
    %v605 = vmul.f32 %v563, 0.01
    %v606 = vmul.f32 %v568, 0.01
    %v607 = vmul.f32 %v573, 0.01
    %v608 = vmax.f32 %v418, %v576
    %v609 = vmax.f32 %v423, %v577
    %v610 = vmax.f32 %v428, %v578
    %v611 = vmax.f32 %v433, %v579
    %v612 = vmax.f32 %v438, %v580
    %v613 = vmax.f32 %v443, %v581
    %v614 = vmax.f32 %v448, %v582
    %v615 = vmax.f32 %v453, %v583
    %v616 = vmax.f32 %v458, %v584
    %v617 = vmax.f32 %v463, %v585
    %v618 = vmax.f32 %v468, %v586
    %v619 = vmax.f32 %v473, %v587
    %v620 = vmax.f32 %v478, %v588
    %v621 = vmax.f32 %v483, %v589
    %v622 = vmax.f32 %v488, %v590
    %v623 = vmax.f32 %v493, %v591
    %v624 = vmax.f32 %v498, %v592
    %v625 = vmax.f32 %v503, %v593
    %v626 = vmax.f32 %v508, %v594
    %v627 = vmax.f32 %v513, %v595
    %v628 = vmax.f32 %v518, %v596
    %v629 = vmax.f32 %v523, %v597
    %v630 = vmax.f32 %v528, %v598
    %v631 = vmax.f32 %v533, %v599
    %v632 = vmax.f32 %v538, %v600
    %v633 = vmax.f32 %v543, %v601
    %v634 = vmax.f32 %v548, %v602
    %v635 = vmax.f32 %v553, %v603
    %v636 = vmax.f32 %v558, %v604
    %v637 = vmax.f32 %v563, %v605
    %v638 = vmax.f32 %v568, %v606
    %v639 = vmax.f32 %v573, %v607
    %v640 = vld [vmem:[%s3] sm:$0xff]
    %v641 = vld [vmem:[%s3 + $0x8] sm:$0xff]
    %v642 = vld [vmem:[%s3 + $0x10] sm:$0xff]
    %v643 = vld [vmem:[%s3 + $0x18] sm:$0xff]
    %v644 = vld [vmem:[%s3 + $0x20] sm:$0xff]
    %v645 = vld [vmem:[%s3 + $0x28] sm:$0xff]
    %v646 = vld [vmem:[%s3 + $0x30] sm:$0xff]
    %v647 = vld [vmem:[%s3 + $0x38] sm:$0xff]
    %v648 = vld [vmem:[%s3 + $0x40] sm:$0xff]
    %v649 = vld [vmem:[%s3 + $0x48] sm:$0xff]
    %v650 = vld [vmem:[%s3 + $0x50] sm:$0xff]
    %v651 = vld [vmem:[%s3 + $0x58] sm:$0xff]
    %v652 = vld [vmem:[%s3 + $0x60] sm:$0xff]
    %v653 = vld [vmem:[%s3 + $0x68] sm:$0xff]
    %v654 = vld [vmem:[%s3 + $0x70] sm:$0xff]
    %v655 = vld [vmem:[%s3 + $0x78] sm:$0xff]
    %v656 = vld [vmem:[%s3 + $0x80] sm:$0xff]
    %v657 = vld [vmem:[%s3 + $0x88] sm:$0xff]
    %v658 = vld [vmem:[%s3 + $0x90] sm:$0xff]
    %v659 = vld [vmem:[%s3 + $0x98] sm:$0xff]
    %v660 = vld [vmem:[%s3 + $0xa0] sm:$0xff]
    %v661 = vld [vmem:[%s3 + $0xa8] sm:$0xff]
    %v662 = vld [vmem:[%s3 + $0xb0] sm:$0xff]
    %v663 = vld [vmem:[%s3 + $0xb8] sm:$0xff]
    %v664 = vld [vmem:[%s3 + $0xc0] sm:$0xff]
    %v665 = vld [vmem:[%s3 + $0xc8] sm:$0xff]
    %v666 = vld [vmem:[%s3 + $0xd0] sm:$0xff]
    %v667 = vld [vmem:[%s3 + $0xd8] sm:$0xff]
    %v668 = vld [vmem:[%s3 + $0xe0] sm:$0xff]
    %v669 = vld [vmem:[%s3 + $0xe8] sm:$0xff]
    %v670 = vld [vmem:[%s3 + $0xf0] sm:$0xff]
    %v671 = vld [vmem:[%s3 + $0xf8] sm:$0xff]
    %v672 = vld [vmem:[%s3 + $0x100] sm:$0xff]
    %v673 = vld [vmem:[%s3 + $0x108] sm:$0xff]
    %v674 = vld [vmem:[%s3 + $0x110] sm:$0xff]
    %v675 = vld [vmem:[%s3 + $0x118] sm:$0xff]
    %v676 = vld [vmem:[%s3 + $0x120] sm:$0xff]
    %v677 = vld [vmem:[%s3 + $0x128] sm:$0xff]
    %v678 = vld [vmem:[%s3 + $0x130] sm:$0xff]
    %v679 = vld [vmem:[%s3 + $0x138] sm:$0xff]
    %v680 = vld [vmem:[%s3 + $0x140] sm:$0xff]
    %v681 = vld [vmem:[%s3 + $0x148] sm:$0xff]
    %v682 = vld [vmem:[%s3 + $0x150] sm:$0xff]
    %v683 = vld [vmem:[%s3 + $0x158] sm:$0xff]
    %v684 = vld [vmem:[%s3 + $0x160] sm:$0xff]
    %v685 = vld [vmem:[%s3 + $0x168] sm:$0xff]
    %v686 = vld [vmem:[%s3 + $0x170] sm:$0xff]
    %v687 = vld [vmem:[%s3 + $0x178] sm:$0xff]
    %v688 = vld [vmem:[%s3 + $0x180] sm:$0xff]
    %v689 = vld [vmem:[%s3 + $0x188] sm:$0xff]
    %v690 = vld [vmem:[%s3 + $0x190] sm:$0xff]
    %v691 = vld [vmem:[%s3 + $0x198] sm:$0xff]
    %v692 = vld [vmem:[%s3 + $0x1a0] sm:$0xff]
    %v693 = vld [vmem:[%s3 + $0x1a8] sm:$0xff]
    %v694 = vld [vmem:[%s3 + $0x1b0] sm:$0xff]
    %v695 = vld [vmem:[%s3 + $0x1b8] sm:$0xff]
    %v696 = vld [vmem:[%s3 + $0x1c0] sm:$0xff]
    %v697 = vld [vmem:[%s3 + $0x1c8] sm:$0xff]
    %v698 = vld [vmem:[%s3 + $0x1d0] sm:$0xff]
    %v699 = vld [vmem:[%s3 + $0x1d8] sm:$0xff]
    %v700 = vld [vmem:[%s3 + $0x1e0] sm:$0xff]
    %v701 = vld [vmem:[%s3 + $0x1e8] sm:$0xff]
    %v702 = vld [vmem:[%s3 + $0x1f0] sm:$0xff]
    %v703 = vld [vmem:[%s3 + $0x1f8] sm:$0xff]
    %v704 = vld [vmem:[%s4] sm:$0xff]
    %v705 = vld [vmem:[%s4 + $0x8] sm:$0xff]
    %v706 = vld [vmem:[%s4 + $0x10] sm:$0xff]
    %v707 = vld [vmem:[%s4 + $0x18] sm:$0xff]
    %v708 = vld [vmem:[%s4 + $0x20] sm:$0xff]
    %v709 = vld [vmem:[%s4 + $0x28] sm:$0xff]
    %v710 = vld [vmem:[%s4 + $0x30] sm:$0xff]
    %v711 = vld [vmem:[%s4 + $0x38] sm:$0xff]
    %v712 = vld [vmem:[%s4 + $0x40] sm:$0xff]
    %v713 = vld [vmem:[%s4 + $0x48] sm:$0xff]
    %v714 = vld [vmem:[%s4 + $0x50] sm:$0xff]
    %v715 = vld [vmem:[%s4 + $0x58] sm:$0xff]
    %v716 = vld [vmem:[%s4 + $0x60] sm:$0xff]
    %v717 = vld [vmem:[%s4 + $0x68] sm:$0xff]
    %v718 = vld [vmem:[%s4 + $0x70] sm:$0xff]
    %v719 = vld [vmem:[%s4 + $0x78] sm:$0xff]
    %v720 = vld [vmem:[%s4 + $0x80] sm:$0xff]
    %v721 = vld [vmem:[%s4 + $0x88] sm:$0xff]
    %v722 = vld [vmem:[%s4 + $0x90] sm:$0xff]
    %v723 = vld [vmem:[%s4 + $0x98] sm:$0xff]
    %v724 = vld [vmem:[%s4 + $0xa0] sm:$0xff]
    %v725 = vld [vmem:[%s4 + $0xa8] sm:$0xff]
    %v726 = vld [vmem:[%s4 + $0xb0] sm:$0xff]
    %v727 = vld [vmem:[%s4 + $0xb8] sm:$0xff]
    %v728 = vld [vmem:[%s4 + $0xc0] sm:$0xff]
    %v729 = vld [vmem:[%s4 + $0xc8] sm:$0xff]
    %v730 = vld [vmem:[%s4 + $0xd0] sm:$0xff]
    %v731 = vld [vmem:[%s4 + $0xd8] sm:$0xff]
    %v732 = vld [vmem:[%s4 + $0xe0] sm:$0xff]
    %v733 = vld [vmem:[%s4 + $0xe8] sm:$0xff]
    %v734 = vld [vmem:[%s4 + $0xf0] sm:$0xff]
    %v735 = vld [vmem:[%s4 + $0xf8] sm:$0xff]
    %737 = vset.pattern.permute.xlu0 0
    %738 = vperm.xlu0 %737, %v704
    %v739 = vpop.permute.xlu0 %738
    %742 = vset.pattern.permute.xlu0 0
    %743 = vperm.xlu0 %742, %v705
    %v744 = vpop.permute.xlu0 %743
    %747 = vset.pattern.permute.xlu0 0
    %748 = vperm.xlu0 %747, %v706
    %v749 = vpop.permute.xlu0 %748
    %752 = vset.pattern.permute.xlu0 0
    %753 = vperm.xlu0 %752, %v707
    %v754 = vpop.permute.xlu0 %753
    %757 = vset.pattern.permute.xlu0 0
    %758 = vperm.xlu0 %757, %v708
    %v759 = vpop.permute.xlu0 %758
    %762 = vset.pattern.permute.xlu0 0
    %763 = vperm.xlu0 %762, %v709
    %v764 = vpop.permute.xlu0 %763
    %767 = vset.pattern.permute.xlu0 0
    %768 = vperm.xlu0 %767, %v710
    %v769 = vpop.permute.xlu0 %768
    %772 = vset.pattern.permute.xlu0 0
    %773 = vperm.xlu0 %772, %v711
    %v774 = vpop.permute.xlu0 %773
    %777 = vset.pattern.permute.xlu0 0
    %778 = vperm.xlu0 %777, %v712
    %v779 = vpop.permute.xlu0 %778
    %782 = vset.pattern.permute.xlu0 0
    %783 = vperm.xlu0 %782, %v713
    %v784 = vpop.permute.xlu0 %783
    %787 = vset.pattern.permute.xlu0 0
    %788 = vperm.xlu0 %787, %v714
    %v789 = vpop.permute.xlu0 %788
    %792 = vset.pattern.permute.xlu0 0
    %793 = vperm.xlu0 %792, %v715
    %v794 = vpop.permute.xlu0 %793
    %797 = vset.pattern.permute.xlu0 0
    %798 = vperm.xlu0 %797, %v716
    %v799 = vpop.permute.xlu0 %798
    %802 = vset.pattern.permute.xlu0 0
    %803 = vperm.xlu0 %802, %v717
    %v804 = vpop.permute.xlu0 %803
    %807 = vset.pattern.permute.xlu0 0
    %808 = vperm.xlu0 %807, %v718
    %v809 = vpop.permute.xlu0 %808
    %812 = vset.pattern.permute.xlu0 0
    %813 = vperm.xlu0 %812, %v719
    %v814 = vpop.permute.xlu0 %813
    %817 = vset.pattern.permute.xlu0 0
    %818 = vperm.xlu0 %817, %v720
    %v819 = vpop.permute.xlu0 %818
    %822 = vset.pattern.permute.xlu0 0
    %823 = vperm.xlu0 %822, %v721
    %v824 = vpop.permute.xlu0 %823
    %827 = vset.pattern.permute.xlu0 0
    %828 = vperm.xlu0 %827, %v722
    %v829 = vpop.permute.xlu0 %828
    %832 = vset.pattern.permute.xlu0 0
    %833 = vperm.xlu0 %832, %v723
    %v834 = vpop.permute.xlu0 %833
    %837 = vset.pattern.permute.xlu0 0
    %838 = vperm.xlu0 %837, %v724
    %v839 = vpop.permute.xlu0 %838
    %842 = vset.pattern.permute.xlu0 0
    %843 = vperm.xlu0 %842, %v725
    %v844 = vpop.permute.xlu0 %843
    %847 = vset.pattern.permute.xlu0 0
    %848 = vperm.xlu0 %847, %v726
    %v849 = vpop.permute.xlu0 %848
    %852 = vset.pattern.permute.xlu0 0
    %853 = vperm.xlu0 %852, %v727
    %v854 = vpop.permute.xlu0 %853
    %857 = vset.pattern.permute.xlu0 0
    %858 = vperm.xlu0 %857, %v728
    %v859 = vpop.permute.xlu0 %858
    %862 = vset.pattern.permute.xlu0 0
    %863 = vperm.xlu0 %862, %v729
    %v864 = vpop.permute.xlu0 %863
    %867 = vset.pattern.permute.xlu0 0
    %868 = vperm.xlu0 %867, %v730
    %v869 = vpop.permute.xlu0 %868
    %872 = vset.pattern.permute.xlu0 0
    %873 = vperm.xlu0 %872, %v731
    %v874 = vpop.permute.xlu0 %873
    %877 = vset.pattern.permute.xlu0 0
    %878 = vperm.xlu0 %877, %v732
    %v879 = vpop.permute.xlu0 %878
    %882 = vset.pattern.permute.xlu0 0
    %883 = vperm.xlu0 %882, %v733
    %v884 = vpop.permute.xlu0 %883
    %887 = vset.pattern.permute.xlu0 0
    %888 = vperm.xlu0 %887, %v734
    %v889 = vpop.permute.xlu0 %888
    %892 = vset.pattern.permute.xlu0 0
    %893 = vperm.xlu0 %892, %v735
    %v894 = vpop.permute.xlu0 %893
    %896 = vmatprep.subr.mxu0 0.0
    %897 = vmatpush1.msra.mxu0 %v623
    %898 = vmatprep.subr.mxu0 0.0
    %899 = vmatpush1.msra.mxu0 %v622
    %900 = vmatprep.subr.mxu0 0.0
    %901 = vmatpush1.msra.mxu0 %v621
    %902 = vmatprep.subr.mxu0 0.0
    %903 = vmatpush1.msra.mxu0 %v620
    %904 = vmatprep.subr.mxu0 0.0
    %905 = vmatpush1.msra.mxu0 %v619
    %906 = vmatprep.subr.mxu0 0.0
    %907 = vmatpush1.msra.mxu0 %v618
    %908 = vmatprep.subr.mxu0 0.0
    %909 = vmatpush1.msra.mxu0 %v617
    %910 = vmatprep.subr.mxu0 0.0
    %911 = vmatpush1.msra.mxu0 %v616
    %912 = vmatprep.subr.mxu0 0.0
    %913 = vmatpush1.msra.mxu0 %v615
    %914 = vmatprep.subr.mxu0 0.0
    %915 = vmatpush1.msra.mxu0 %v614
    %916 = vmatprep.subr.mxu0 0.0
    %917 = vmatpush1.msra.mxu0 %v613
    %918 = vmatprep.subr.mxu0 0.0
    %919 = vmatpush1.msra.mxu0 %v612
    %920 = vmatprep.subr.mxu0 0.0
    %921 = vmatpush1.msra.mxu0 %v611
    %922 = vmatprep.subr.mxu0 0.0
    %923 = vmatpush1.msra.mxu0 %v610
    %924 = vmatprep.subr.mxu0 0.0
    %925 = vmatpush1.msra.mxu0 %v609
    %926 = vmatprep.subr.mxu0 0.0
    %927 = vmatpush1.msra.mxu0 %v608
    %928 = vmatprep.subr.mxu0 0.0
    %929 = vmatpush2.msra.mxu0 %v639
    %930 = vmatprep.subr.mxu0 0.0
    %931 = vmatpush2.msra.mxu0 %v638
    %932 = vmatprep.subr.mxu0 0.0
    %933 = vmatpush2.msra.mxu0 %v637
    %934 = vmatprep.subr.mxu0 0.0
    %935 = vmatpush2.msra.mxu0 %v636
    %936 = vmatprep.subr.mxu0 0.0
    %937 = vmatpush2.msra.mxu0 %v635
    %938 = vmatprep.subr.mxu0 0.0
    %939 = vmatpush2.msra.mxu0 %v634
    %940 = vmatprep.subr.mxu0 0.0
    %941 = vmatpush2.msra.mxu0 %v633
    %942 = vmatprep.subr.mxu0 0.0
    %943 = vmatpush2.msra.mxu0 %v632
    %944 = vmatprep.subr.mxu0 0.0
    %945 = vmatpush2.msra.mxu0 %v631
    %946 = vmatprep.subr.mxu0 0.0
    %947 = vmatpush2.msra.mxu0 %v630
    %948 = vmatprep.subr.mxu0 0.0
    %949 = vmatpush2.msra.mxu0 %v629
    %950 = vmatprep.subr.mxu0 0.0
    %951 = vmatpush2.msra.mxu0 %v628
    %952 = vmatprep.subr.mxu0 0.0
    %953 = vmatpush2.msra.mxu0 %v627
    %954 = vmatprep.subr.mxu0 0.0
    %955 = vmatpush2.msra.mxu0 %v626
    %956 = vmatprep.subr.mxu0 0.0
    %957 = vmatpush2.msra.mxu0 %v625
    %958 = vmatprep.subr.mxu0 0.0
    %959 = vmatpush2.msra.mxu0 %v624
    %960 = vmatprep.mubr.f32.mxu0 %v641
    %961 = vmatmul.mubr.f32.gmra.mxu0 %v640
    %v962 = vpop.f32.mrf.mxu0
    %v963 = vadd.f32 %v739, %v962
    %v964 = vpop.f32.mrf.mxu0
    %965 = vmatprep.mubr.f32.mxu0 %v643
    %966 = vmatmul.mubr.f32.gmra.mxu0 %v642
    %v967 = vpop.f32.mrf.mxu0
    %v968 = vadd.f32 %v744, %v967
    %v969 = vpop.f32.mrf.mxu0
    %970 = vmatprep.mubr.f32.mxu0 %v645
    %971 = vmatmul.mubr.f32.gmra.mxu0 %v644
    %v972 = vpop.f32.mrf.mxu0
    %v973 = vadd.f32 %v749, %v972
    %v974 = vpop.f32.mrf.mxu0
    %975 = vmatprep.mubr.f32.mxu0 %v647
    %976 = vmatmul.mubr.f32.gmra.mxu0 %v646
    %v977 = vpop.f32.mrf.mxu0
    %v978 = vadd.f32 %v754, %v977
    %v979 = vpop.f32.mrf.mxu0
    %980 = vmatprep.mubr.f32.mxu0 %v649
    %981 = vmatmul.mubr.f32.gmra.mxu0 %v648
    %v982 = vpop.f32.mrf.mxu0
    %v983 = vadd.f32 %v759, %v982
    %v984 = vpop.f32.mrf.mxu0
    %985 = vmatprep.mubr.f32.mxu0 %v651
    %986 = vmatmul.mubr.f32.gmra.mxu0 %v650
    %v987 = vpop.f32.mrf.mxu0
    %v988 = vadd.f32 %v764, %v987
    %v989 = vpop.f32.mrf.mxu0
    %990 = vmatprep.mubr.f32.mxu0 %v653
    %991 = vmatmul.mubr.f32.gmra.mxu0 %v652
    %v992 = vpop.f32.mrf.mxu0
    %v993 = vadd.f32 %v769, %v992
    %v994 = vpop.f32.mrf.mxu0
    %995 = vmatprep.mubr.f32.mxu0 %v655
    %996 = vmatmul.mubr.f32.gmra.mxu0 %v654
    %v997 = vpop.f32.mrf.mxu0
    %v998 = vadd.f32 %v774, %v997
    %v999 = vpop.f32.mrf.mxu0
    %1000 = vmatprep.mubr.f32.mxu0 %v657
    %1001 = vmatmul.mubr.f32.gmra.mxu0 %v656
    %v1002 = vpop.f32.mrf.mxu0
    %v1003 = vadd.f32 %v779, %v1002
    %v1004 = vpop.f32.mrf.mxu0
    %1005 = vmatprep.mubr.f32.mxu0 %v659
    %1006 = vmatmul.mubr.f32.gmra.mxu0 %v658
    %v1007 = vpop.f32.mrf.mxu0
    %v1008 = vadd.f32 %v784, %v1007
    %v1009 = vpop.f32.mrf.mxu0
    %1010 = vmatprep.mubr.f32.mxu0 %v661
    %1011 = vmatmul.mubr.f32.gmra.mxu0 %v660
    %v1012 = vpop.f32.mrf.mxu0
    %v1013 = vadd.f32 %v789, %v1012
    %v1014 = vpop.f32.mrf.mxu0
    %1015 = vmatprep.mubr.f32.mxu0 %v663
    %1016 = vmatmul.mubr.f32.gmra.mxu0 %v662
    %v1017 = vpop.f32.mrf.mxu0
    %v1018 = vadd.f32 %v794, %v1017
    %v1019 = vpop.f32.mrf.mxu0
    %1020 = vmatprep.mubr.f32.mxu0 %v665
    %1021 = vmatmul.mubr.f32.gmra.mxu0 %v664
    %v1022 = vpop.f32.mrf.mxu0
    %v1023 = vadd.f32 %v799, %v1022
    %v1024 = vpop.f32.mrf.mxu0
    %1025 = vmatprep.mubr.f32.mxu0 %v667
    %1026 = vmatmul.mubr.f32.gmra.mxu0 %v666
    %v1027 = vpop.f32.mrf.mxu0
    %v1028 = vadd.f32 %v804, %v1027
    %v1029 = vpop.f32.mrf.mxu0
    %1030 = vmatprep.mubr.f32.mxu0 %v669
    %1031 = vmatmul.mubr.f32.gmra.mxu0 %v668
    %v1032 = vpop.f32.mrf.mxu0
    %v1033 = vadd.f32 %v809, %v1032
    %v1034 = vpop.f32.mrf.mxu0
    %1035 = vmatprep.mubr.f32.mxu0 %v671
    %1036 = vmatmul.mubr.f32.gmra.mxu0 %v670
    %v1037 = vpop.f32.mrf.mxu0
    %v1038 = vadd.f32 %v814, %v1037
    %v1039 = vpop.f32.mrf.mxu0
    %1040 = vmatprep.mubr.f32.mxu0 %v673
    %1041 = vmatmul.mubr.f32.gmra.mxu0 %v672
    %v1042 = vpop.f32.mrf.mxu0
    %v1043 = vadd.f32 %v819, %v1042
    %v1044 = vpop.f32.mrf.mxu0
    %1045 = vmatprep.mubr.f32.mxu0 %v675
    %1046 = vmatmul.mubr.f32.gmra.mxu0 %v674
    %v1047 = vpop.f32.mrf.mxu0
    %v1048 = vadd.f32 %v824, %v1047
    %v1049 = vpop.f32.mrf.mxu0
    %1050 = vmatprep.mubr.f32.mxu0 %v677
    %1051 = vmatmul.mubr.f32.gmra.mxu0 %v676
    %v1052 = vpop.f32.mrf.mxu0
    %v1053 = vadd.f32 %v829, %v1052
    %v1054 = vpop.f32.mrf.mxu0
    %1055 = vmatprep.mubr.f32.mxu0 %v679
    %1056 = vmatmul.mubr.f32.gmra.mxu0 %v678
    %v1057 = vpop.f32.mrf.mxu0
    %v1058 = vadd.f32 %v834, %v1057
    %v1059 = vpop.f32.mrf.mxu0
    %1060 = vmatprep.mubr.f32.mxu0 %v681
    %1061 = vmatmul.mubr.f32.gmra.mxu0 %v680
    %v1062 = vpop.f32.mrf.mxu0
    %v1063 = vadd.f32 %v839, %v1062
    %v1064 = vpop.f32.mrf.mxu0
    %1065 = vmatprep.mubr.f32.mxu0 %v683
    %1066 = vmatmul.mubr.f32.gmra.mxu0 %v682
    %v1067 = vpop.f32.mrf.mxu0
    %v1068 = vadd.f32 %v844, %v1067
    %v1069 = vpop.f32.mrf.mxu0
    %1070 = vmatprep.mubr.f32.mxu0 %v685
    %1071 = vmatmul.mubr.f32.gmra.mxu0 %v684
    %v1072 = vpop.f32.mrf.mxu0
    %v1073 = vadd.f32 %v849, %v1072
    %v1074 = vpop.f32.mrf.mxu0
    %1075 = vmatprep.mubr.f32.mxu0 %v687
    %1076 = vmatmul.mubr.f32.gmra.mxu0 %v686
    %v1077 = vpop.f32.mrf.mxu0
    %v1078 = vadd.f32 %v854, %v1077
    %v1079 = vpop.f32.mrf.mxu0
    %1080 = vmatprep.mubr.f32.mxu0 %v689
    %1081 = vmatmul.mubr.f32.gmra.mxu0 %v688
    %v1082 = vpop.f32.mrf.mxu0
    %v1083 = vadd.f32 %v859, %v1082
    %v1084 = vpop.f32.mrf.mxu0
    %1085 = vmatprep.mubr.f32.mxu0 %v691
    %1086 = vmatmul.mubr.f32.gmra.mxu0 %v690
    %v1087 = vpop.f32.mrf.mxu0
    %v1088 = vadd.f32 %v864, %v1087
    %v1089 = vpop.f32.mrf.mxu0
    %1090 = vmatprep.mubr.f32.mxu0 %v693
    %1091 = vmatmul.mubr.f32.gmra.mxu0 %v692
    %v1092 = vpop.f32.mrf.mxu0
    %v1093 = vadd.f32 %v869, %v1092
    %v1094 = vpop.f32.mrf.mxu0
    %1095 = vmatprep.mubr.f32.mxu0 %v695
    %1096 = vmatmul.mubr.f32.gmra.mxu0 %v694
    %v1097 = vpop.f32.mrf.mxu0
    %v1098 = vadd.f32 %v874, %v1097
    %v1099 = vpop.f32.mrf.mxu0
    %1100 = vmatprep.mubr.f32.mxu0 %v697
    %1101 = vmatmul.mubr.f32.gmra.mxu0 %v696
    %v1102 = vpop.f32.mrf.mxu0
    %v1103 = vadd.f32 %v879, %v1102
    %v1104 = vpop.f32.mrf.mxu0
    %1105 = vmatprep.mubr.f32.mxu0 %v699
    %1106 = vmatmul.mubr.f32.gmra.mxu0 %v698
    %v1107 = vpop.f32.mrf.mxu0
    %v1108 = vadd.f32 %v884, %v1107
    %v1109 = vpop.f32.mrf.mxu0
    %1110 = vmatprep.mubr.f32.mxu0 %v701
    %1111 = vmatmul.mubr.f32.gmra.mxu0 %v700
    %v1112 = vpop.f32.mrf.mxu0
    %v1113 = vadd.f32 %v889, %v1112
    %v1114 = vpop.f32.mrf.mxu0
    %1115 = vmatprep.mubr.f32.mxu0 %v703
    %1116 = vmatmul.mubr.f32.gmra.mxu0 %v702
    %v1117 = vpop.f32.mrf.mxu0
    %v1118 = vadd.f32 %v894, %v1117
    %v1119 = vpop.f32.mrf.mxu0
    %1120 = vdwg.mxu0
    %v1121 = vmul.f32 %v963, 0.01
    %v1122 = vmul.f32 %v968, 0.01
    %v1123 = vmul.f32 %v973, 0.01
    %v1124 = vmul.f32 %v978, 0.01
    %v1125 = vmul.f32 %v983, 0.01
    %v1126 = vmul.f32 %v988, 0.01
    %v1127 = vmul.f32 %v993, 0.01
    %v1128 = vmul.f32 %v998, 0.01
    %v1129 = vmul.f32 %v1003, 0.01
    %v1130 = vmul.f32 %v1008, 0.01
    %v1131 = vmul.f32 %v1013, 0.01
    %v1132 = vmul.f32 %v1018, 0.01
    %v1133 = vmul.f32 %v1023, 0.01
    %v1134 = vmul.f32 %v1028, 0.01
    %v1135 = vmul.f32 %v1033, 0.01
    %v1136 = vmul.f32 %v1038, 0.01
    %v1137 = vmul.f32 %v1043, 0.01
    %v1138 = vmul.f32 %v1048, 0.01
    %v1139 = vmul.f32 %v1053, 0.01
    %v1140 = vmul.f32 %v1058, 0.01
    %v1141 = vmul.f32 %v1063, 0.01
    %v1142 = vmul.f32 %v1068, 0.01
    %v1143 = vmul.f32 %v1073, 0.01
    %v1144 = vmul.f32 %v1078, 0.01
    %v1145 = vmul.f32 %v1083, 0.01
    %v1146 = vmul.f32 %v1088, 0.01
    %v1147 = vmul.f32 %v1093, 0.01
    %v1148 = vmul.f32 %v1098, 0.01
    %v1149 = vmul.f32 %v1103, 0.01
    %v1150 = vmul.f32 %v1108, 0.01
    %v1151 = vmul.f32 %v1113, 0.01
    %v1152 = vmul.f32 %v1118, 0.01
    %v1153 = vmax.f32 %v963, %v1121
    %v1154 = vmax.f32 %v968, %v1122
    %v1155 = vmax.f32 %v973, %v1123
    %v1156 = vmax.f32 %v978, %v1124
    %v1157 = vmax.f32 %v983, %v1125
    %v1158 = vmax.f32 %v988, %v1126
    %v1159 = vmax.f32 %v993, %v1127
    %v1160 = vmax.f32 %v998, %v1128
    %v1161 = vmax.f32 %v1003, %v1129
    %v1162 = vmax.f32 %v1008, %v1130
    %v1163 = vmax.f32 %v1013, %v1131
    %v1164 = vmax.f32 %v1018, %v1132
    %v1165 = vmax.f32 %v1023, %v1133
    %v1166 = vmax.f32 %v1028, %v1134
    %v1167 = vmax.f32 %v1033, %v1135
    %v1168 = vmax.f32 %v1038, %v1136
    %v1169 = vmax.f32 %v1043, %v1137
    %v1170 = vmax.f32 %v1048, %v1138
    %v1171 = vmax.f32 %v1053, %v1139
    %v1172 = vmax.f32 %v1058, %v1140
    %v1173 = vmax.f32 %v1063, %v1141
    %v1174 = vmax.f32 %v1068, %v1142
    %v1175 = vmax.f32 %v1073, %v1143
    %v1176 = vmax.f32 %v1078, %v1144
    %v1177 = vmax.f32 %v1083, %v1145
    %v1178 = vmax.f32 %v1088, %v1146
    %v1179 = vmax.f32 %v1093, %v1147
    %v1180 = vmax.f32 %v1098, %v1148
    %v1181 = vmax.f32 %v1103, %v1149
    %v1182 = vmax.f32 %v1108, %v1150
    %v1183 = vmax.f32 %v1113, %v1151
    %v1184 = vmax.f32 %v1118, %v1152
    %v1185 = vld [vmem:[%s5] sm:$0x3]
    %v1186 = vld [vmem:[%s6] sm:$0x1]
    %vm1187 = vcmask 31744
    %v1189 = vsel %vm1187, %v1186, 0
    %vm1191 = vcmask 1043456
    %v1193 = vsel %vm1191, %v29, 0
    %1195 = vmatprep.subr.mxu0 0.0
    %1196 = vmatpush1.msra.mxu0 0.0
    %1197 = vmatprep.subr.mxu0 0.0
    %1198 = vmatpush1.msra.mxu0 0.0
    %1199 = vmatprep.subr.mxu0 0.0
    %1200 = vmatpush1.msra.mxu0 0.0
    %1201 = vmatprep.subr.mxu0 0.0
    %1202 = vmatpush1.msra.mxu0 0.0
    %1203 = vmatprep.subr.mxu0 0.0
    %1204 = vmatpush1.msra.mxu0 0.0
    %1205 = vmatprep.subr.mxu0 0.0
    %1206 = vmatpush1.msra.mxu0 0.0
    %1207 = vmatprep.subr.mxu0 0.0
    %1208 = vmatpush1.msra.mxu0 0.0
    %1209 = vmatprep.subr.mxu0 0.0
    %1210 = vmatpush1.msra.mxu0 0.0
    %1211 = vmatprep.subr.mxu0 0.0
    %1212 = vmatpush1.msra.mxu0 0.0
    %1213 = vmatprep.subr.mxu0 0.0
    %1214 = vmatpush1.msra.mxu0 0.0
    %1215 = vmatprep.subr.mxu0 0.0
    %1216 = vmatpush1.msra.mxu0 0.0
    %1217 = vmatprep.subr.mxu0 0.0
    %1218 = vmatpush1.msra.mxu0 0.0
    %1219 = vmatprep.subr.mxu0 0.0
    %1220 = vmatpush1.msra.mxu0 0.0
    %1221 = vmatprep.subr.mxu0 0.0
    %1222 = vmatpush1.msra.mxu0 0.0
    %1223 = vmatprep.subr.mxu0 0.0
    %1224 = vmatpush1.msra.mxu0 0.0
    %1225 = vmatprep.subr.mxu0 0.0
    %1226 = vmatpush1.msra.mxu0 %v1193
    %1227 = vmatprep.subr.mxu0 0.0
    %1228 = vmatpush2.msra.mxu0 0.0
    %1229 = vmatprep.subr.mxu0 0.0
    %1230 = vmatpush2.msra.mxu0 0.0
    %1231 = vmatprep.subr.mxu0 0.0
    %1232 = vmatpush2.msra.mxu0 0.0
    %1233 = vmatprep.subr.mxu0 0.0
    %1234 = vmatpush2.msra.mxu0 0.0
    %1235 = vmatprep.subr.mxu0 0.0
    %1236 = vmatpush2.msra.mxu0 0.0
    %1237 = vmatprep.subr.mxu0 0.0
    %1238 = vmatpush2.msra.mxu0 0.0
    %1239 = vmatprep.subr.mxu0 0.0
    %1240 = vmatpush2.msra.mxu0 0.0
    %1241 = vmatprep.subr.mxu0 0.0
    %1242 = vmatpush2.msra.mxu0 0.0
    %1243 = vmatprep.subr.mxu0 0.0
    %1244 = vmatpush2.msra.mxu0 0.0
    %1245 = vmatprep.subr.mxu0 0.0
    %1246 = vmatpush2.msra.mxu0 0.0
    %1247 = vmatprep.subr.mxu0 0.0
    %1248 = vmatpush2.msra.mxu0 0.0
    %1249 = vmatprep.subr.mxu0 0.0
    %1250 = vmatpush2.msra.mxu0 0.0
    %1251 = vmatprep.subr.mxu0 0.0
    %1252 = vmatpush2.msra.mxu0 0.0
    %1253 = vmatprep.subr.mxu0 0.0
    %1254 = vmatpush2.msra.mxu0 0.0
    %1255 = vmatprep.subr.mxu0 0.0
    %1256 = vmatpush2.msra.mxu0 0.0
    %1257 = vmatprep.subr.mxu0 0.0
    %1258 = vmatpush2.msra.mxu0 0.0
    %1259 = vmatprep.mubr.f32.mxu0 0.0
    %1260 = vmatmul.mubr.f32.gmra.mxu0 %v1189
    %v1261 = vpop.f32.mrf.mxu0
    %v1262 = vadd.f32 0.0, %v1261
    %v1263 = vpop.f32.mrf.mxu0
    %1264 = vdwg.mxu0
    %v1266 = vlaneseq
    %v1267 = vshrl.u32 %v1266, 7
    %v1268 = vsub.s32 0, %v1267
    %v1269 = vrot.slane %v1185, %v1268
    %v1270 = vlaneseq
    %v1271 = vshrl.u32 %v1270, 7
    %v1272 = vsub.s32 1, %v1271
    %v1273 = vrot.slane %v1185, %v1272
    %1276 = vmatprep.subr.mxu0 0.0
    %1277 = vmatpush1.msra.mxu0 %v1168
    %1278 = vmatprep.subr.mxu0 0.0
    %1279 = vmatpush1.msra.mxu0 %v1167
    %1280 = vmatprep.subr.mxu0 0.0
    %1281 = vmatpush1.msra.mxu0 %v1166
    %1282 = vmatprep.subr.mxu0 0.0
    %1283 = vmatpush1.msra.mxu0 %v1165
    %1284 = vmatprep.subr.mxu0 0.0
    %1285 = vmatpush1.msra.mxu0 %v1164
    %1286 = vmatprep.subr.mxu0 0.0
    %1287 = vmatpush1.msra.mxu0 %v1163
    %1288 = vmatprep.subr.mxu0 0.0
    %1289 = vmatpush1.msra.mxu0 %v1162
    %1290 = vmatprep.subr.mxu0 0.0
    %1291 = vmatpush1.msra.mxu0 %v1161
    %1292 = vmatprep.subr.mxu0 0.0
    %1293 = vmatpush1.msra.mxu0 %v1160
    %1294 = vmatprep.subr.mxu0 0.0
    %1295 = vmatpush1.msra.mxu0 %v1159
    %1296 = vmatprep.subr.mxu0 0.0
    %1297 = vmatpush1.msra.mxu0 %v1158
    %1298 = vmatprep.subr.mxu0 0.0
    %1299 = vmatpush1.msra.mxu0 %v1157
    %1300 = vmatprep.subr.mxu0 0.0
    %1301 = vmatpush1.msra.mxu0 %v1156
    %1302 = vmatprep.subr.mxu0 0.0
    %1303 = vmatpush1.msra.mxu0 %v1155
    %1304 = vmatprep.subr.mxu0 0.0
    %1305 = vmatpush1.msra.mxu0 %v1154
    %1306 = vmatprep.subr.mxu0 0.0
    %1307 = vmatpush1.msra.mxu0 %v1153
    %1308 = vmatprep.subr.mxu0 0.0
    %1309 = vmatpush2.msra.mxu0 %v1184
    %1310 = vmatprep.subr.mxu0 0.0
    %1311 = vmatpush2.msra.mxu0 %v1183
    %1312 = vmatprep.subr.mxu0 0.0
    %1313 = vmatpush2.msra.mxu0 %v1182
    %1314 = vmatprep.subr.mxu0 0.0
    %1315 = vmatpush2.msra.mxu0 %v1181
    %1316 = vmatprep.subr.mxu0 0.0
    %1317 = vmatpush2.msra.mxu0 %v1180
    %1318 = vmatprep.subr.mxu0 0.0
    %1319 = vmatpush2.msra.mxu0 %v1179
    %1320 = vmatprep.subr.mxu0 0.0
    %1321 = vmatpush2.msra.mxu0 %v1178
    %1322 = vmatprep.subr.mxu0 0.0
    %1323 = vmatpush2.msra.mxu0 %v1177
    %1324 = vmatprep.subr.mxu0 0.0
    %1325 = vmatpush2.msra.mxu0 %v1176
    %1326 = vmatprep.subr.mxu0 0.0
    %1327 = vmatpush2.msra.mxu0 %v1175
    %1328 = vmatprep.subr.mxu0 0.0
    %1329 = vmatpush2.msra.mxu0 %v1174
    %1330 = vmatprep.subr.mxu0 0.0
    %1331 = vmatpush2.msra.mxu0 %v1173
    %1332 = vmatprep.subr.mxu0 0.0
    %1333 = vmatpush2.msra.mxu0 %v1172
    %1334 = vmatprep.subr.mxu0 0.0
    %1335 = vmatpush2.msra.mxu0 %v1171
    %1336 = vmatprep.subr.mxu0 0.0
    %1337 = vmatpush2.msra.mxu0 %v1170
    %1338 = vmatprep.subr.mxu0 0.0
    %1339 = vmatpush2.msra.mxu0 %v1169
    %1340 = vmatprep.mubr.f32.mxu0 %v1273
    %1341 = vmatmul.mubr.f32.gmra.mxu0 %v1269
    %v1342 = vpop.f32.mrf.mxu0
    %v1343 = vadd.f32 %v1262, %v1342
    %v1344 = vpop.f32.mrf.mxu0
    %1345 = vdwg.mxu0
    %v1346 = vxor.u32 %v1343, 2147483648
    %v1347 = vmul.f32 %v1346, 1.442695
    %v1348 = vpow.pop %v1347
    %v1349 = vadd.f32 %v1348, 1.0
    %v1350 = vrcp.pop %v1349
    %v1351 = vmul.f32 1.0, %v1350
    %1352 = vst [vmem:[#allocation2] sm:$0x1] %v1351
    // Predicated region
    $region30: #{tpu_custom_call.1} parent=1 // pred_check
      _
    $region31: #{tpu_custom_call.1} parent=1 // pred_check_branch
      %1354 = sbr.rel (0) target = $region33
    $region32: #{tpu_custom_call.1} parent=1 // pred_region
      %s1356 = ssub.s32 16, 16
      %1357 = vsyncadd [#allocation3], %s1356
      %s1359 = sshll.u32 [#allocation2], 4
      %s1360 = int_to_ptr.vmem [resolvable:$true] %s1359
      %1362 = dma.vmem_to_hbm [thread:$0]  %s1360, 16, %s7, [#allocation3]
    $region33: #{tpu_custom_call.1} parent=1 // pred_fallthru
      _
    // Predicated region
    $region34: #{tpu_custom_call.1} parent=1 // pred_check
      _
    $region35: #{tpu_custom_call.1} parent=1 // pred_check_branch
      %1364 = sbr.rel (0) target = $region37
    $region36: #{tpu_custom_call.1} parent=1 // pred_region
      %1365 = dma.done [#allocation3], 16
    $region37: #{tpu_custom_call.1} parent=1 // pred_fallthru
      _
    %1366 = vsyncpa [#allocation3], 1

</llo_original>
